<compile_context>
chip_gen: v5e
topology: v5e:2x2
jax: 0.10.0
libtpu: 0.0.40
codegen_flags: <defaults>
</compile_context>

<pallas_src>
import functools

import jax
import jax.numpy as jnp
from jax.experimental import pallas as pl
from jax.experimental.pallas import tpu as pltpu

GAMMA = 0.001
HIDDEN = 100
HIDDEN_PAD = 128
NUM_HIDDEN_LAYERS = 5     # nn.Linear(hidden, hidden) repeated 5 times
MAX_TILE_B = 512          # max batch rows per grid step; multiple of 128 (lane-dense)


def ml_kernel(x_ref, a_ref, w0_ref, b0_ref, wh_ref, bh_ref, w6_ref, b6_ref,
              out_ref, *, eps):
    # x_ref : (TB, D)   f32       a_ref : (1, 1, TB) f32
    # w0_ref: (D, 128)  bf16      b0_ref: (1, 128)   f32
    # wh_ref: (5,128,128) bf16    bh_ref: (5, 1, 128) f32
    # w6_ref: (8, 128)  bf16  (head column transposed; replicated over 8 sublanes)
    # b6_ref: (1, 1)    f32
    # out_ref: (1, 1, TB) f32  -> one scalar per batch row, lane-dense
    x = x_ref[...].astype(jnp.bfloat16)

    # Layer 0: bf16 MXU matmul, f32 accumulate, f32 bias + ReLU.
    h = jnp.dot(x, w0_ref[...], preferred_element_type=jnp.float32) + b0_ref[...]
    h = jnp.maximum(h, 0.0)

    # 5 hidden layers (weights resident in VMEM across all grid steps).
    for i in range(NUM_HIDDEN_LAYERS):
        h = jnp.dot(h.astype(jnp.bfloat16), wh_ref[i],
                    preferred_element_type=jnp.float32) + bh_ref[i]
        h = jnp.maximum(h, 0.0)

    # Head: (8,128) contracted with (TB,128) on the 128-dim -> (8, TB).  All 8 rows are
    # identical (replicated w6); keep row 0 so the epilogue runs once per batch row,
    # lane-dense.
    r = jax.lax.dot_general(
        w6_ref[...], h.astype(jnp.bfloat16),
        dimension_numbers=(((1,), (1,)), ((), ())),
        preferred_element_type=jnp.float32)
    r = r[0:1, :] + b6_ref[...]                      # (1, TB)
    w = jnp.abs(r)                                   # localizer output
    # log(a/(eps+w)) == log(a) - log(eps+w); a > 0 (same domain assumption as reference).
    out_ref[0] = jnp.log(a_ref[0]) - jnp.log(eps + w)


def ml_forward(a, x, params, eps=GAMMA, max_tile_b=MAX_TILE_B):
    """a: (B,) float32 (>0), x: (B, D) float32 -> (B,) float32"""
    (w0, b0, wh, bh, w6, b6) = params
    B, D = x.shape

    # Adaptive batch tile: multiple of 128 (lane-dense output), capped at max_tile_b,
    # so small batches do not pay for a full 512-row tile of padded compute.
    tile_b = min(max_tile_b, pl.cdiv(B, 128) * 128)
    nt = pl.cdiv(B, tile_b)
    B_pad = nt * tile_b

    # Pad the ragged batch tile (padded rows are discarded after the call).
    x_p = jnp.pad(x.astype(jnp.float32), ((0, B_pad - B), (0, 0)))
    a_p = jnp.pad(a.astype(jnp.float32), (0, B_pad - B), constant_values=1.0)
    a3 = a_p.reshape(nt, 1, tile_b)

    out = pl.pallas_call(
        functools.partial(ml_kernel, eps=eps),
        grid=(nt,),
        in_specs=[
            pl.BlockSpec((tile_b, D), lambda i: (i, 0)),           # x: tiled over batch
            pl.BlockSpec((1, 1, tile_b), lambda i: (i, 0, 0)),     # a: tiled over batch
            pl.BlockSpec((D, HIDDEN_PAD), lambda i: (0, 0)),       # weights: resident
            pl.BlockSpec((1, HIDDEN_PAD), lambda i: (0, 0)),
            pl.BlockSpec((NUM_HIDDEN_LAYERS, HIDDEN_PAD, HIDDEN_PAD),
                         lambda i: (0, 0, 0)),
            pl.BlockSpec((NUM_HIDDEN_LAYERS, 1, HIDDEN_PAD),
                         lambda i: (0, 0, 0)),
            pl.BlockSpec((8, HIDDEN_PAD), lambda i: (0, 0)),
            pl.BlockSpec((1, 1), lambda i: (0, 0)),
        ],
        out_specs=pl.BlockSpec((1, 1, tile_b), lambda i: (i, 0, 0)),
        out_shape=jax.ShapeDtypeStruct((nt, 1, tile_b), jnp.float32),
        compiler_params=pltpu.CompilerParams(
            dimension_semantics=("parallel",),          # megacore / both TCs on v7x
            vmem_limit_bytes=32 * 1024 * 1024),         # explicit, safe on v5e/v6e/v7x
    )(x_p, a3, w0, b0, wh, bh, w6, b6)

    return out.reshape(B_pad)[:B]


def init_params(key, dim):
    """Deterministic synthetic weights, pre-padded to 128 lanes; matmul weights in bf16."""
    ks = jax.random.split(key, 14)
    s = 0.1

    # Layer 0: (dim, 100) -> padded (dim, 128)
    w0 = jnp.zeros((dim, HIDDEN_PAD), jnp.float32)
    w0 = w0.at[:, :HIDDEN].set(s * jax.random.normal(ks[0], (dim, HIDDEN)))
    b0 = jnp.zeros((1, HIDDEN_PAD), jnp.float32)
    b0 = b0.at[:, :HIDDEN].set(s * jax.random.normal(ks[1], (1, HIDDEN)))

    # Hidden layers 1..5: (100, 100) -> padded (128, 128), stacked
    wh = jnp.zeros((NUM_HIDDEN_LAYERS, HIDDEN_PAD, HIDDEN_PAD), jnp.float32)
    bh = jnp.zeros((NUM_HIDDEN_LAYERS, 1, HIDDEN_PAD), jnp.float32)
    for i in range(NUM_HIDDEN_LAYERS):
        wh = wh.at[i, :HIDDEN, :HIDDEN].set(
            s * jax.random.normal(ks[2 + 2 * i], (HIDDEN, HIDDEN)))
        bh = bh.at[i, :, :HIDDEN].set(
            s * jax.random.normal(ks[3 + 2 * i], (1, HIDDEN)))

    # Output head (100, 1) stored transposed as a lane-row, replicated on 8 sublanes.
    w6_col = s * jax.random.normal(ks[12], (HIDDEN,))
    w6 = jnp.zeros((8, HIDDEN_PAD), jnp.float32)
    w6 = w6.at[:, :HIDDEN].set(jnp.broadcast_to(w6_col, (8, HIDDEN)))
    # Positive head-bias offset keeps |head| away from 0 so the f32-vs-bf16 comparison
    # through 1/(eps + w) is well-conditioned in the self-test (test-only choice).
    b6 = (0.5 + s * jax.random.normal(ks[13], (1, 1))).astype(jnp.float32)

    # bf16 weights (MXU operands); biases stay f32.
    return (w0.astype(jnp.bfloat16), b0,
            wh.astype(jnp.bfloat16), bh,
            w6.astype(jnp.bfloat16), b6)


def ml_reference(a, x, params, eps=GAMMA):
    """Pure-JAX (f32 math) reference of the PyTorch ML.forward."""
    (w0, b0, wh, bh, w6, b6) = params
    w0f = w0.astype(jnp.float32)
    whf = wh.astype(jnp.float32)
    w6f = w6.astype(jnp.float32)
    h = jnp.maximum(x @ w0f[:, :HIDDEN] + b0[0, :HIDDEN], 0.0)
    for i in range(NUM_HIDDEN_LAYERS):
        h = jnp.maximum(h @ whf[i, :HIDDEN, :HIDDEN] + bh[i, 0, :HIDDEN], 0.0)
    o = h @ w6f[0, :HIDDEN] + b6[0, 0]
    w = jnp.abs(o)
    return jnp.log(a / (eps + w))


if __name__ == "__main__":
    key = jax.random.PRNGKey(0)
    k_p, k_x, k_a = jax.random.split(key, 3)

    B, D = 8, 32  # small test shapes; dim = 32
    params = init_params(k_p, D)
    x = jax.random.normal(k_x, (B, D), jnp.float32)
    a = jax.random.uniform(k_a, (B,), jnp.float32, minval=0.5, maxval=1.5)

    out = ml_forward(a, x, params)
    jax.block_until_ready(out)

    ref = ml_reference(a, x, params)
    assert out.shape == (B,)
    # bf16 matmuls (f32 accumulation) vs pure-f32 reference -> loosened tolerance.
    assert jnp.allclose(out, ref, atol=5e-2, rtol=5e-2), (out, ref)

    print("KERNEL_OK")
</pallas_src>

<mosaic_0001>
module attributes {stable_mosaic.version = 11 : i64} {
  func.func @ml_kernel(%arg0: i32, %arg1: memref<128x32xf32, #tpu.memory_space<vmem>>, %arg2: memref<1x1x128xf32, #tpu.memory_space<vmem>>, %arg3: memref<32x128xbf16, #tpu.memory_space<vmem>>, %arg4: memref<1x128xf32, #tpu.memory_space<vmem>>, %arg5: memref<5x128x128xbf16, #tpu.memory_space<vmem>>, %arg6: memref<5x1x128xf32, #tpu.memory_space<vmem>>, %arg7: memref<8x128xbf16, #tpu.memory_space<vmem>>, %arg8: memref<1x1xf32, #tpu.memory_space<vmem>>, %arg9: memref<1x1x128xf32, #tpu.memory_space<vmem>>) attributes {dimension_semantics = [#tpu.dimension_semantics<parallel>], iteration_bounds = array<i64: 1>, scalar_prefetch = 0 : i64, scratch_operands = 0 : i64, tpu.core_type = #tpu.core_type<tc>, window_params = [{transform_indices = @transform_0, window_bounds = array<i64: 128, 32>}, {transform_indices = @transform_1, window_bounds = array<i64: 1, 1, 128>}, {pipeline_mode = #tpu.pipeline_mode<synchronous>, transform_indices = @transform_2, window_bounds = array<i64: 32, 128>}, {pipeline_mode = #tpu.pipeline_mode<synchronous>, transform_indices = @transform_3, window_bounds = array<i64: 1, 128>}, {pipeline_mode = #tpu.pipeline_mode<synchronous>, transform_indices = @transform_4, window_bounds = array<i64: 5, 128, 128>}, {pipeline_mode = #tpu.pipeline_mode<synchronous>, transform_indices = @transform_5, window_bounds = array<i64: 5, 1, 128>}, {pipeline_mode = #tpu.pipeline_mode<synchronous>, transform_indices = @transform_6, window_bounds = array<i64: 8, 128>}, {pipeline_mode = #tpu.pipeline_mode<synchronous>, transform_indices = @transform_7, window_bounds = array<i64: 1, 1>}, {transform_indices = @transform_8, window_bounds = array<i64: 1, 1, 128>}]} {
    %c0 = arith.constant 0 : index
    %c0_0 = arith.constant 0 : index
    %0 = vector.load %arg1[%c0, %c0_0] : memref<128x32xf32, #tpu.memory_space<vmem>>, vector<128x32xf32>
    %1 = arith.truncf %0 : vector<128x32xf32> to vector<128x32xbf16>
    %c0_1 = arith.constant 0 : index
    %c0_2 = arith.constant 0 : index
    %2 = vector.load %arg3[%c0_1, %c0_2] : memref<32x128xbf16, #tpu.memory_space<vmem>>, vector<32x128xbf16>
    %cst = arith.constant dense<0.000000e+00> : vector<128x128xf32>
    %3 = tpu.matmul %1, %2, %cst {dimension_numbers = #tpu.dot_dimension_numbers<[1], [0], [0], [1], [0, 0, 1, 1], [], []>} : vector<128x32xbf16>, vector<32x128xbf16>, vector<128x128xf32> -> vector<128x128xf32>
    %c0_3 = arith.constant 0 : index
    %c0_4 = arith.constant 0 : index
    %4 = vector.load %arg4[%c0_3, %c0_4] : memref<1x128xf32, #tpu.memory_space<vmem>>, vector<1x128xf32>
    %5 = vector.broadcast %4 : vector<1x128xf32> to vector<128x128xf32>
    %6 = arith.addf %3, %5 : vector<128x128xf32>
    %cst_5 = arith.constant 0.000000e+00 : f32
    %7 = vector.broadcast %cst_5 : f32 to vector<128x128xf32>
    %8 = arith.maximumf %6, %7 : vector<128x128xf32>
    %9 = arith.truncf %8 : vector<128x128xf32> to vector<128x128xbf16>
    %c0_6 = arith.constant 0 : index
    %c0_7 = arith.constant 0 : index
    %c0_8 = arith.constant 0 : index
    %10 = vector.load %arg5[%c0_6, %c0_7, %c0_8] : memref<5x128x128xbf16, #tpu.memory_space<vmem>>, vector<1x128x128xbf16>
    %11 = vector.shape_cast %10 : vector<1x128x128xbf16> to vector<128x128xbf16>
    %cst_9 = arith.constant dense<0.000000e+00> : vector<128x128xf32>
    %12 = tpu.matmul %9, %11, %cst_9 {dimension_numbers = #tpu.dot_dimension_numbers<[1], [0], [0], [1], [0, 0, 1, 1], [], []>} : vector<128x128xbf16>, vector<128x128xbf16>, vector<128x128xf32> -> vector<128x128xf32>
    %c0_10 = arith.constant 0 : index
    %c0_11 = arith.constant 0 : index
    %c0_12 = arith.constant 0 : index
    %13 = vector.load %arg6[%c0_10, %c0_11, %c0_12] : memref<5x1x128xf32, #tpu.memory_space<vmem>>, vector<1x1x128xf32>
    %14 = vector.shape_cast %13 : vector<1x1x128xf32> to vector<1x128xf32>
    %15 = vector.broadcast %14 : vector<1x128xf32> to vector<128x128xf32>
    %16 = arith.addf %12, %15 : vector<128x128xf32>
    %cst_13 = arith.constant 0.000000e+00 : f32
    %17 = vector.broadcast %cst_13 : f32 to vector<128x128xf32>
    %18 = arith.maximumf %16, %17 : vector<128x128xf32>
    %19 = arith.truncf %18 : vector<128x128xf32> to vector<128x128xbf16>
    %c1 = arith.constant 1 : index
    %c0_14 = arith.constant 0 : index
    %c0_15 = arith.constant 0 : index
    %20 = vector.load %arg5[%c1, %c0_14, %c0_15] : memref<5x128x128xbf16, #tpu.memory_space<vmem>>, vector<1x128x128xbf16>
    %21 = vector.shape_cast %20 : vector<1x128x128xbf16> to vector<128x128xbf16>
    %cst_16 = arith.constant dense<0.000000e+00> : vector<128x128xf32>
    %22 = tpu.matmul %19, %21, %cst_16 {dimension_numbers = #tpu.dot_dimension_numbers<[1], [0], [0], [1], [0, 0, 1, 1], [], []>} : vector<128x128xbf16>, vector<128x128xbf16>, vector<128x128xf32> -> vector<128x128xf32>
    %c1_17 = arith.constant 1 : index
    %c0_18 = arith.constant 0 : index
    %c0_19 = arith.constant 0 : index
    %23 = vector.load %arg6[%c1_17, %c0_18, %c0_19] : memref<5x1x128xf32, #tpu.memory_space<vmem>>, vector<1x1x128xf32>
    %24 = vector.shape_cast %23 : vector<1x1x128xf32> to vector<1x128xf32>
    %25 = vector.broadcast %24 : vector<1x128xf32> to vector<128x128xf32>
    %26 = arith.addf %22, %25 : vector<128x128xf32>
    %cst_20 = arith.constant 0.000000e+00 : f32
    %27 = vector.broadcast %cst_20 : f32 to vector<128x128xf32>
    %28 = arith.maximumf %26, %27 : vector<128x128xf32>
    %29 = arith.truncf %28 : vector<128x128xf32> to vector<128x128xbf16>
    %c2 = arith.constant 2 : index
    %c0_21 = arith.constant 0 : index
    %c0_22 = arith.constant 0 : index
    %30 = vector.load %arg5[%c2, %c0_21, %c0_22] : memref<5x128x128xbf16, #tpu.memory_space<vmem>>, vector<1x128x128xbf16>
    %31 = vector.shape_cast %30 : vector<1x128x128xbf16> to vector<128x128xbf16>
    %cst_23 = arith.constant dense<0.000000e+00> : vector<128x128xf32>
    %32 = tpu.matmul %29, %31, %cst_23 {dimension_numbers = #tpu.dot_dimension_numbers<[1], [0], [0], [1], [0, 0, 1, 1], [], []>} : vector<128x128xbf16>, vector<128x128xbf16>, vector<128x128xf32> -> vector<128x128xf32>
    %c2_24 = arith.constant 2 : index
    %c0_25 = arith.constant 0 : index
    %c0_26 = arith.constant 0 : index
    %33 = vector.load %arg6[%c2_24, %c0_25, %c0_26] : memref<5x1x128xf32, #tpu.memory_space<vmem>>, vector<1x1x128xf32>
    %34 = vector.shape_cast %33 : vector<1x1x128xf32> to vector<1x128xf32>
    %35 = vector.broadcast %34 : vector<1x128xf32> to vector<128x128xf32>
    %36 = arith.addf %32, %35 : vector<128x128xf32>
    %cst_27 = arith.constant 0.000000e+00 : f32
    %37 = vector.broadcast %cst_27 : f32 to vector<128x128xf32>
    %38 = arith.maximumf %36, %37 : vector<128x128xf32>
    %39 = arith.truncf %38 : vector<128x128xf32> to vector<128x128xbf16>
    %c3 = arith.constant 3 : index
    %c0_28 = arith.constant 0 : index
    %c0_29 = arith.constant 0 : index
    %40 = vector.load %arg5[%c3, %c0_28, %c0_29] : memref<5x128x128xbf16, #tpu.memory_space<vmem>>, vector<1x128x128xbf16>
    %41 = vector.shape_cast %40 : vector<1x128x128xbf16> to vector<128x128xbf16>
    %cst_30 = arith.constant dense<0.000000e+00> : vector<128x128xf32>
    %42 = tpu.matmul %39, %41, %cst_30 {dimension_numbers = #tpu.dot_dimension_numbers<[1], [0], [0], [1], [0, 0, 1, 1], [], []>} : vector<128x128xbf16>, vector<128x128xbf16>, vector<128x128xf32> -> vector<128x128xf32>
    %c3_31 = arith.constant 3 : index
    %c0_32 = arith.constant 0 : index
    %c0_33 = arith.constant 0 : index
    %43 = vector.load %arg6[%c3_31, %c0_32, %c0_33] : memref<5x1x128xf32, #tpu.memory_space<vmem>>, vector<1x1x128xf32>
    %44 = vector.shape_cast %43 : vector<1x1x128xf32> to vector<1x128xf32>
    %45 = vector.broadcast %44 : vector<1x128xf32> to vector<128x128xf32>
    %46 = arith.addf %42, %45 : vector<128x128xf32>
    %cst_34 = arith.constant 0.000000e+00 : f32
    %47 = vector.broadcast %cst_34 : f32 to vector<128x128xf32>
    %48 = arith.maximumf %46, %47 : vector<128x128xf32>
    %49 = arith.truncf %48 : vector<128x128xf32> to vector<128x128xbf16>
    %c4 = arith.constant 4 : index
    %c0_35 = arith.constant 0 : index
    %c0_36 = arith.constant 0 : index
    %50 = vector.load %arg5[%c4, %c0_35, %c0_36] : memref<5x128x128xbf16, #tpu.memory_space<vmem>>, vector<1x128x128xbf16>
    %51 = vector.shape_cast %50 : vector<1x128x128xbf16> to vector<128x128xbf16>
    %cst_37 = arith.constant dense<0.000000e+00> : vector<128x128xf32>
    %52 = tpu.matmul %49, %51, %cst_37 {dimension_numbers = #tpu.dot_dimension_numbers<[1], [0], [0], [1], [0, 0, 1, 1], [], []>} : vector<128x128xbf16>, vector<128x128xbf16>, vector<128x128xf32> -> vector<128x128xf32>
    %c4_38 = arith.constant 4 : index
    %c0_39 = arith.constant 0 : index
    %c0_40 = arith.constant 0 : index
    %53 = vector.load %arg6[%c4_38, %c0_39, %c0_40] : memref<5x1x128xf32, #tpu.memory_space<vmem>>, vector<1x1x128xf32>
    %54 = vector.shape_cast %53 : vector<1x1x128xf32> to vector<1x128xf32>
    %55 = vector.broadcast %54 : vector<1x128xf32> to vector<128x128xf32>
    %56 = arith.addf %52, %55 : vector<128x128xf32>
    %cst_41 = arith.constant 0.000000e+00 : f32
    %57 = vector.broadcast %cst_41 : f32 to vector<128x128xf32>
    %58 = arith.maximumf %56, %57 : vector<128x128xf32>
    %c0_42 = arith.constant 0 : index
    %c0_43 = arith.constant 0 : index
    %59 = vector.load %arg7[%c0_42, %c0_43] : memref<8x128xbf16, #tpu.memory_space<vmem>>, vector<8x128xbf16>
    %60 = arith.truncf %58 : vector<128x128xf32> to vector<128x128xbf16>
    %cst_44 = arith.constant dense<0.000000e+00> : vector<8x128xf32>
    %61 = tpu.matmul %59, %60, %cst_44 {dimension_numbers = #tpu.dot_dimension_numbers<[1], [1], [0], [0], [0, 0, 1, 0], [], []>} : vector<8x128xbf16>, vector<128x128xbf16>, vector<8x128xf32> -> vector<8x128xf32>
    %62 = vector.extract_strided_slice %61 {offsets = [0, 0], sizes = [1, 128], strides = [1, 1]} : vector<8x128xf32> to vector<1x128xf32>
    %c0_45 = arith.constant 0 : index
    %c0_46 = arith.constant 0 : index
    %63 = vector.load %arg8[%c0_45, %c0_46] : memref<1x1xf32, #tpu.memory_space<vmem>>, vector<1x1xf32>
    %64 = vector.broadcast %63 : vector<1x1xf32> to vector<1x128xf32>
    %65 = arith.addf %62, %64 : vector<1x128xf32>
    %66 = math.absf %65 : vector<1x128xf32>
    %c0_47 = arith.constant 0 : index
    %c0_48 = arith.constant 0 : index
    %c0_49 = arith.constant 0 : index
    %67 = vector.load %arg2[%c0_47, %c0_48, %c0_49] : memref<1x1x128xf32, #tpu.memory_space<vmem>>, vector<1x1x128xf32>
    %68 = vector.shape_cast %67 : vector<1x1x128xf32> to vector<1x128xf32>
    %69 = math.log %68 : vector<1x128xf32>
    %cst_50 = arith.constant 1.000000e-03 : f32
    %70 = vector.broadcast %cst_50 : f32 to vector<1x128xf32>
    %71 = arith.addf %70, %66 : vector<1x128xf32>
    %72 = math.log %71 : vector<1x128xf32>
    %73 = arith.subf %69, %72 : vector<1x128xf32>
    %c0_51 = arith.constant 0 : index
    %c0_52 = arith.constant 0 : index
    %c0_53 = arith.constant 0 : index
    %74 = vector.load %arg9[%c0_51, %c0_52, %c0_53] : memref<1x1x128xf32, #tpu.memory_space<vmem>>, vector<1x1x128xf32>
    %75 = vector.shape_cast %74 : vector<1x1x128xf32> to vector<1x128xf32>
    %76 = vector.shape_cast %73 : vector<1x128xf32> to vector<1x1x128xf32>
    tpu.vector_store %arg9[%c0_51, %c0_52, %c0_53], %76 {strides = array<i32>} : memref<1x1x128xf32, #tpu.memory_space<vmem>>, vector<1x1x128xf32>,
    return
  }
  func.func @transform_0(%arg0: i32) -> (i32, i32) {
    %c0_i32 = arith.constant 0 : i32
    %c0_i32_0 = arith.constant 0 : i32
    return %arg0, %c0_i32 : i32, i32
  }
  func.func @transform_1(%arg0: i32) -> (i32, i32, i32) {
    %c0_i32 = arith.constant 0 : i32
    %c0_i32_0 = arith.constant 0 : i32
    %c0_i32_1 = arith.constant 0 : i32
    return %arg0, %c0_i32, %c0_i32_0 : i32, i32, i32
  }
  func.func @transform_2(%arg0: i32) -> (i32, i32) {
    %c0_i32 = arith.constant 0 : i32
    %c0_i32_0 = arith.constant 0 : i32
    %c0_i32_1 = arith.constant 0 : i32
    return %c0_i32, %c0_i32_0 : i32, i32
  }
  func.func @transform_3(%arg0: i32) -> (i32, i32) {
    %c0_i32 = arith.constant 0 : i32
    %c0_i32_0 = arith.constant 0 : i32
    %c0_i32_1 = arith.constant 0 : i32
    return %c0_i32, %c0_i32_0 : i32, i32
  }
  func.func @transform_4(%arg0: i32) -> (i32, i32, i32) {
    %c0_i32 = arith.constant 0 : i32
    %c0_i32_0 = arith.constant 0 : i32
    %c0_i32_1 = arith.constant 0 : i32
    %c0_i32_2 = arith.constant 0 : i32
    return %c0_i32, %c0_i32_0, %c0_i32_1 : i32, i32, i32
  }
  func.func @transform_5(%arg0: i32) -> (i32, i32, i32) {
    %c0_i32 = arith.constant 0 : i32
    %c0_i32_0 = arith.constant 0 : i32
    %c0_i32_1 = arith.constant 0 : i32
    %c0_i32_2 = arith.constant 0 : i32
    return %c0_i32, %c0_i32_0, %c0_i32_1 : i32, i32, i32
  }
  func.func @transform_6(%arg0: i32) -> (i32, i32) {
    %c0_i32 = arith.constant 0 : i32
    %c0_i32_0 = arith.constant 0 : i32
    %c0_i32_1 = arith.constant 0 : i32
    return %c0_i32, %c0_i32_0 : i32, i32
  }
  func.func @transform_7(%arg0: i32) -> (i32, i32) {
    %c0_i32 = arith.constant 0 : i32
    %c0_i32_0 = arith.constant 0 : i32
    %c0_i32_1 = arith.constant 0 : i32
    return %c0_i32, %c0_i32_0 : i32, i32
  }
  func.func @transform_8(%arg0: i32) -> (i32, i32, i32) {
    %c0_i32 = arith.constant 0 : i32
    %c0_i32_0 = arith.constant 0 : i32
    %c0_i32_1 = arith.constant 0 : i32
    return %arg0, %c0_i32, %c0_i32_0 : i32, i32, i32
  }
}

</mosaic_0001>

<llo_original>
// kernel: tpu_custom_call.1
$region0: #{tpu_custom_call.1}
  #allocation0 [shape = 'u32[]', space=smem, size = 0x4, offset = 0x4, fixed_abs, tag = 'smem constant byte address 0x4 - core index']
  #allocation1 [shape = 'u32[72,128]{1,0:T(1,128)}', space=vmem, size = 0x9000, scoped, tag = 'internal scratch']
  #allocation2 [shape = 'f32[1,1]{1,0:T(1,128)S(1)}', space=vmem, size = 0x200, scoped, tag = 'scoped memory for tpu_custom_call.1']
  %s0 = inlined_call_operand.vmem [shape: f32[128,32], index: 0, kind: input, shape index: {}]
  %s1 = inlined_call_operand.vmem [shape: f32[1,1,128], index: 1, kind: input, shape index: {}]
  %s2 = inlined_call_operand.vmem [shape: bf16[32,128], index: 2, kind: input, shape index: {}]
  %s3 = inlined_call_operand.vmem [shape: f32[1,128], index: 3, kind: input, shape index: {}]
  %s4 = inlined_call_operand.hbm [shape: bf16[5,128,128], index: 4, kind: input, shape index: {}]
  %s5 = inlined_call_operand.vmem [shape: f32[5,1,128], index: 5, kind: input, shape index: {}]
  %s6 = inlined_call_operand.vmem [shape: bf16[8,128], index: 6, kind: input, shape index: {}]
  %s7 = inlined_call_operand.<no memory space> [shape: f32[1,1], index: 7, kind: input, shape index: {}]
  %s8 = inlined_call_operand.hbm [shape: f32[1,1,128], index: 8, kind: output, shape index: {}]
  %s9 = sld [smem:[#allocation0]]
  $region46: #{tpu_custom_call.1} parent=0
    _
  %s11 = ssub.s32 1, %s9
  %s12 = scalar_select 0, %s11, %s9
  %v13 = vstv %s7
  %14 = vst [vmem:[#allocation2] sm:$0x1] %v13
  $region1: #{tpu_custom_call.1} parent=0
    #allocation3 [shape = 'u8[163840]{0}', space=vmem, size = 0x28000, scoped, tag = 'input window, operand 4, single buffered']
    #allocation4 [shape = 's32[1]{0}', space=sflag, size = 0x4, scoped, tag = 'scoped memory for tpu_custom_call.1']
    #allocation5 [shape = 's32[1]{0}', space=sflag, size = 0x4, scoped, tag = 'scoped memory for tpu_custom_call.1']
    #allocation6 [shape = 'u8[512]{0}', space=vmem, size = 0x400, scoped, tag = 'output window, operand 0, single buffered']
    %15 = vsyncpa [#allocation4], 0
    %16 = vsyncpa [#allocation5], 0
    // Predicated region
    $region2: #{tpu_custom_call.1} parent=1 // pred_check
      _
    $region3: #{tpu_custom_call.1} parent=1 // pred_check_branch
      %18 = sbr.rel (0) target = $region5
    $region4: #{tpu_custom_call.1} parent=1 // pred_region
      _
    $region5: #{tpu_custom_call.1} parent=1 // pred_fallthru
      _
    // Predicated region
    $region6: #{tpu_custom_call.1} parent=1 // pred_check
      _
    $region7: #{tpu_custom_call.1} parent=1 // pred_check_branch
      %20 = sbr.rel (0) target = $region9
    $region8: #{tpu_custom_call.1} parent=1 // pred_region
      _
    $region9: #{tpu_custom_call.1} parent=1 // pred_fallthru
      _
    // Predicated region
    $region10: #{tpu_custom_call.1} parent=1 // pred_check
      _
    $region11: #{tpu_custom_call.1} parent=1 // pred_check_branch
      %22 = sbr.rel (0) target = $region13
    $region12: #{tpu_custom_call.1} parent=1 // pred_region
      _
    $region13: #{tpu_custom_call.1} parent=1 // pred_fallthru
      _
    // Predicated region
    $region14: #{tpu_custom_call.1} parent=1 // pred_check
      _
    $region15: #{tpu_custom_call.1} parent=1 // pred_check_branch
      %24 = sbr.rel (0) target = $region17
    $region16: #{tpu_custom_call.1} parent=1 // pred_region
      _
    $region17: #{tpu_custom_call.1} parent=1 // pred_fallthru
      _
    // Predicated region
    $region18: #{tpu_custom_call.1} parent=1 // pred_check
      _
    $region19: #{tpu_custom_call.1} parent=1 // pred_check_branch
      %26 = sbr.rel (0) target = $region21
    $region20: #{tpu_custom_call.1} parent=1 // pred_region
      %28 = vsyncadd [#allocation4], 0
      %s29 = sshll.u32 %s4, 4
      %s30 = int_to_ptr.hbm [resolvable:$true] %s29
      %s31 = sshll.u32 [#allocation3], 4
      %s32 = int_to_ptr.vmem [resolvable:$true] %s31
      %37 = dma.hbm_to_vmem [thread:$0]  %s30, 5120, %s32, [#allocation4], 64, 64, 4
    $region21: #{tpu_custom_call.1} parent=1 // pred_fallthru
      _
    // Predicated region
    $region22: #{tpu_custom_call.1} parent=1 // pred_check
      _
    $region23: #{tpu_custom_call.1} parent=1 // pred_check_branch
      %39 = sbr.rel (0) target = $region25
    $region24: #{tpu_custom_call.1} parent=1 // pred_region
      _
    $region25: #{tpu_custom_call.1} parent=1 // pred_fallthru
      _
    // Predicated region
    $region26: #{tpu_custom_call.1} parent=1 // pred_check
      _
    $region27: #{tpu_custom_call.1} parent=1 // pred_check_branch
      %41 = sbr.rel (0) target = $region29
    $region28: #{tpu_custom_call.1} parent=1 // pred_region
      _
    $region29: #{tpu_custom_call.1} parent=1 // pred_fallthru
      _
    // Predicated region
    $region30: #{tpu_custom_call.1} parent=1 // pred_check
      _
    $region31: #{tpu_custom_call.1} parent=1 // pred_check_branch
      %43 = sbr.rel (0) target = $region33
    $region32: #{tpu_custom_call.1} parent=1 // pred_region
      _
    $region33: #{tpu_custom_call.1} parent=1 // pred_fallthru
      _
    // Predicated region
    $region34: #{tpu_custom_call.1} parent=1 // pred_check
      _
    $region35: #{tpu_custom_call.1} parent=1 // pred_check_branch
      %45 = sbr.rel (0) target = $region37
    $region36: #{tpu_custom_call.1} parent=1 // pred_region
      %47 = dma.done [#allocation4], 5120
    $region37: #{tpu_custom_call.1} parent=1 // pred_fallthru
      _
    %v49 = vld [vmem:[%s0] sm:$0xff]
    %v50 = vld [vmem:[%s0 + $0x8] sm:$0xff]
    %v51 = vld [vmem:[%s0 + $0x10] sm:$0xff]
    %v52 = vld [vmem:[%s0 + $0x18] sm:$0xff]
    %v53 = vld [vmem:[%s0 + $0x20] sm:$0xff]
    %v54 = vld [vmem:[%s0 + $0x28] sm:$0xff]
    %v55 = vld [vmem:[%s0 + $0x30] sm:$0xff]
    %v56 = vld [vmem:[%s0 + $0x38] sm:$0xff]
    %v57 = vld [vmem:[%s0 + $0x40] sm:$0xff]
    %v58 = vld [vmem:[%s0 + $0x48] sm:$0xff]
    %v59 = vld [vmem:[%s0 + $0x50] sm:$0xff]
    %v60 = vld [vmem:[%s0 + $0x58] sm:$0xff]
    %v61 = vld [vmem:[%s0 + $0x60] sm:$0xff]
    %v62 = vld [vmem:[%s0 + $0x68] sm:$0xff]
    %v63 = vld [vmem:[%s0 + $0x70] sm:$0xff]
    %v64 = vld [vmem:[%s0 + $0x78] sm:$0xff]
    %v65 = vpack.c.bf16 %v50, %v49
    %v66 = vpack.c.bf16 %v52, %v51
    %v67 = vpack.c.bf16 %v54, %v53
    %v68 = vpack.c.bf16 %v56, %v55
    %v69 = vpack.c.bf16 %v58, %v57
    %v70 = vpack.c.bf16 %v60, %v59
    %v71 = vpack.c.bf16 %v62, %v61
    %v72 = vpack.c.bf16 %v64, %v63
    %v73 = vld [vmem:[%s2] sm:$0xf]
    %v74 = vld [vmem:[%s2 + $0x4] sm:$0xf]
    %v75 = vld [vmem:[%s2 + $0x8] sm:$0xf]
    %v76 = vld [vmem:[%s2 + $0xc] sm:$0xf]
    %v77 = vld [vmem:[%s3] sm:$0x1]
    %v79 = vperm.slane %v77, 0
    %v85 = vunpack.c.l.b16 %v73
    %v86 = vunpack.c.l.b16 %v74
    %v87 = vunpack.c.l.b16 %v75
    %v88 = vunpack.c.l.b16 %v76
    %v89 = vpack.c.b16 %v86, %v85
    %v90 = vpack.c.b16 %v88, %v87
    %vm93 = vcmask 261120
    %v95 = vsel %vm93, %v65, 0
    %v98 = vsel %vm93, %v66, 0
    %v101 = vsel %vm93, %v67, 0
    %v104 = vsel %vm93, %v68, 0
    %v107 = vsel %vm93, %v69, 0
    %v110 = vsel %vm93, %v70, 0
    %v113 = vsel %vm93, %v71, 0
    %v116 = vsel %vm93, %v72, 0
    %118 = vmatpush.bf16.msra.mxu0 0
    %119 = vmatpush.bf16.msra.mxu0 0
    %120 = vmatpush.bf16.msra.mxu0 0
    %121 = vmatpush.bf16.msra.mxu0 0
    %122 = vmatpush.bf16.msra.mxu0 0
    %123 = vmatpush.bf16.msra.mxu0 0
    %124 = vmatpush.bf16.msra.mxu0 %v90
    %125 = vmatpush.bf16.msra.mxu0 %v89
    %126 = vmatmul.bf16.gmra.mxu0 %v95
    %v127 = vpop.f32.mrf.mxu0
    %v128 = vadd.f32 %v79, %v127
    %v129 = vpop.f32.mrf.mxu0
    %v130 = vadd.f32 %v79, %v129
    %131 = vmatmul.bf16.gmra.mxu0 %v98
    %v132 = vpop.f32.mrf.mxu0
    %v133 = vadd.f32 %v79, %v132
    %v134 = vpop.f32.mrf.mxu0
    %v135 = vadd.f32 %v79, %v134
    %136 = vmatmul.bf16.gmra.mxu0 %v101
    %v137 = vpop.f32.mrf.mxu0
    %v138 = vadd.f32 %v79, %v137
    %v139 = vpop.f32.mrf.mxu0
    %v140 = vadd.f32 %v79, %v139
    %141 = vmatmul.bf16.gmra.mxu0 %v104
    %v142 = vpop.f32.mrf.mxu0
    %v143 = vadd.f32 %v79, %v142
    %v144 = vpop.f32.mrf.mxu0
    %v145 = vadd.f32 %v79, %v144
    %146 = vmatmul.bf16.gmra.mxu0 %v107
    %v147 = vpop.f32.mrf.mxu0
    %v148 = vadd.f32 %v79, %v147
    %v149 = vpop.f32.mrf.mxu0
    %v150 = vadd.f32 %v79, %v149
    %151 = vmatmul.bf16.gmra.mxu0 %v110
    %v152 = vpop.f32.mrf.mxu0
    %v153 = vadd.f32 %v79, %v152
    %v154 = vpop.f32.mrf.mxu0
    %v155 = vadd.f32 %v79, %v154
    %156 = vmatmul.bf16.gmra.mxu0 %v113
    %v157 = vpop.f32.mrf.mxu0
    %v158 = vadd.f32 %v79, %v157
    %v159 = vpop.f32.mrf.mxu0
    %v160 = vadd.f32 %v79, %v159
    %161 = vmatmul.bf16.gmra.mxu0 %v116
    %v162 = vpop.f32.mrf.mxu0
    %v163 = vadd.f32 %v79, %v162
    %v164 = vpop.f32.mrf.mxu0
    %v165 = vadd.f32 %v79, %v164
    %166 = vdwg.mxu0
    %v167 = vmax.f32 %v128, 0.0
    %v168 = vmax.f32 %v130, 0.0
    %v169 = vmax.f32 %v133, 0.0
    %v170 = vmax.f32 %v135, 0.0
    %v171 = vmax.f32 %v138, 0.0
    %v172 = vmax.f32 %v140, 0.0
    %v173 = vmax.f32 %v143, 0.0
    %v174 = vmax.f32 %v145, 0.0
    %v175 = vmax.f32 %v148, 0.0
    %v176 = vmax.f32 %v150, 0.0
    %v177 = vmax.f32 %v153, 0.0
    %v178 = vmax.f32 %v155, 0.0
    %v179 = vmax.f32 %v158, 0.0
    %v180 = vmax.f32 %v160, 0.0
    %v181 = vmax.f32 %v163, 0.0
    %v182 = vmax.f32 %v165, 0.0
    %v183 = vpack.c.bf16 %v168, %v167
    %v184 = vpack.c.bf16 %v170, %v169
    %v185 = vpack.c.bf16 %v172, %v171
    %v186 = vpack.c.bf16 %v174, %v173
    %v187 = vpack.c.bf16 %v176, %v175
    %v188 = vpack.c.bf16 %v178, %v177
    %v189 = vpack.c.bf16 %v180, %v179
    %v190 = vpack.c.bf16 %v182, %v181
    %v191 = vld [vmem:[#allocation3] sm:$0xf]
    %v192 = vld [vmem:[#allocation3 + $0x4] sm:$0xf]
    %v193 = vld [vmem:[#allocation3 + $0x8] sm:$0xf]
    %v194 = vld [vmem:[#allocation3 + $0xc] sm:$0xf]
    %v195 = vld [vmem:[#allocation3 + $0x10] sm:$0xf]
    %v196 = vld [vmem:[#allocation3 + $0x14] sm:$0xf]
    %v197 = vld [vmem:[#allocation3 + $0x18] sm:$0xf]
    %v198 = vld [vmem:[#allocation3 + $0x1c] sm:$0xf]
    %v199 = vld [vmem:[#allocation3 + $0x20] sm:$0xf]
    %v200 = vld [vmem:[#allocation3 + $0x24] sm:$0xf]
    %v201 = vld [vmem:[#allocation3 + $0x28] sm:$0xf]
    %v202 = vld [vmem:[#allocation3 + $0x2c] sm:$0xf]
    %v203 = vld [vmem:[#allocation3 + $0x30] sm:$0xf]
    %v204 = vld [vmem:[#allocation3 + $0x34] sm:$0xf]
    %v205 = vld [vmem:[#allocation3 + $0x38] sm:$0xf]
    %v206 = vld [vmem:[#allocation3 + $0x3c] sm:$0xf]
    %v207 = vld [vmem:[%s5] sm:$0x1]
    %v209 = vperm.slane %v207, 0
    %v227 = vunpack.c.l.b16 %v191
    %v228 = vunpack.c.l.b16 %v192
    %v229 = vunpack.c.l.b16 %v193
    %v230 = vunpack.c.l.b16 %v194
    %v231 = vunpack.c.l.b16 %v195
    %v232 = vunpack.c.l.b16 %v196
    %v233 = vunpack.c.l.b16 %v197
    %v234 = vunpack.c.l.b16 %v198
    %v235 = vunpack.c.l.b16 %v199
    %v236 = vunpack.c.l.b16 %v200
    %v237 = vunpack.c.l.b16 %v201
    %v238 = vunpack.c.l.b16 %v202
    %v239 = vunpack.c.l.b16 %v203
    %v240 = vunpack.c.l.b16 %v204
    %v241 = vunpack.c.l.b16 %v205
    %v242 = vunpack.c.l.b16 %v206
    %v243 = vpack.c.b16 %v228, %v227
    %v244 = vpack.c.b16 %v230, %v229
    %v245 = vpack.c.b16 %v232, %v231
    %v246 = vpack.c.b16 %v234, %v233
    %v247 = vpack.c.b16 %v236, %v235
    %v248 = vpack.c.b16 %v238, %v237
    %v249 = vpack.c.b16 %v240, %v239
    %v250 = vpack.c.b16 %v242, %v241
    %259 = vmatpush.bf16.msra.mxu0 %v250
    %260 = vmatpush.bf16.msra.mxu0 %v249
    %261 = vmatpush.bf16.msra.mxu0 %v248
    %262 = vmatpush.bf16.msra.mxu0 %v247
    %263 = vmatpush.bf16.msra.mxu0 %v246
    %264 = vmatpush.bf16.msra.mxu0 %v245
    %265 = vmatpush.bf16.msra.mxu0 %v244
    %266 = vmatpush.bf16.msra.mxu0 %v243
    %267 = vmatmul.bf16.gmra.mxu0 %v183
    %v268 = vpop.f32.mrf.mxu0
    %v269 = vadd.f32 %v209, %v268
    %v270 = vpop.f32.mrf.mxu0
    %v271 = vadd.f32 %v209, %v270
    %272 = vmatmul.bf16.gmra.mxu0 %v184
    %v273 = vpop.f32.mrf.mxu0
    %v274 = vadd.f32 %v209, %v273
    %v275 = vpop.f32.mrf.mxu0
    %v276 = vadd.f32 %v209, %v275
    %277 = vmatmul.bf16.gmra.mxu0 %v185
    %v278 = vpop.f32.mrf.mxu0
    %v279 = vadd.f32 %v209, %v278
    %v280 = vpop.f32.mrf.mxu0
    %v281 = vadd.f32 %v209, %v280
    %282 = vmatmul.bf16.gmra.mxu0 %v186
    %v283 = vpop.f32.mrf.mxu0
    %v284 = vadd.f32 %v209, %v283
    %v285 = vpop.f32.mrf.mxu0
    %v286 = vadd.f32 %v209, %v285
    %287 = vmatmul.bf16.gmra.mxu0 %v187
    %v288 = vpop.f32.mrf.mxu0
    %v289 = vadd.f32 %v209, %v288
    %v290 = vpop.f32.mrf.mxu0
    %v291 = vadd.f32 %v209, %v290
    %292 = vmatmul.bf16.gmra.mxu0 %v188
    %v293 = vpop.f32.mrf.mxu0
    %v294 = vadd.f32 %v209, %v293
    %v295 = vpop.f32.mrf.mxu0
    %v296 = vadd.f32 %v209, %v295
    %297 = vmatmul.bf16.gmra.mxu0 %v189
    %v298 = vpop.f32.mrf.mxu0
    %v299 = vadd.f32 %v209, %v298
    %v300 = vpop.f32.mrf.mxu0
    %v301 = vadd.f32 %v209, %v300
    %302 = vmatmul.bf16.gmra.mxu0 %v190
    %v303 = vpop.f32.mrf.mxu0
    %v304 = vadd.f32 %v209, %v303
    %v305 = vpop.f32.mrf.mxu0
    %v306 = vadd.f32 %v209, %v305
    %307 = vdwg.mxu0
    %v308 = vmax.f32 %v269, 0.0
    %v309 = vmax.f32 %v271, 0.0
    %v310 = vmax.f32 %v274, 0.0
    %v311 = vmax.f32 %v276, 0.0
    %v312 = vmax.f32 %v279, 0.0
    %v313 = vmax.f32 %v281, 0.0
    %v314 = vmax.f32 %v284, 0.0
    %v315 = vmax.f32 %v286, 0.0
    %v316 = vmax.f32 %v289, 0.0
    %v317 = vmax.f32 %v291, 0.0
    %v318 = vmax.f32 %v294, 0.0
    %v319 = vmax.f32 %v296, 0.0
    %v320 = vmax.f32 %v299, 0.0
    %v321 = vmax.f32 %v301, 0.0
    %v322 = vmax.f32 %v304, 0.0
    %v323 = vmax.f32 %v306, 0.0
    %v324 = vpack.c.bf16 %v309, %v308
    %v325 = vpack.c.bf16 %v311, %v310
    %v326 = vpack.c.bf16 %v313, %v312
    %v327 = vpack.c.bf16 %v315, %v314
    %v328 = vpack.c.bf16 %v317, %v316
    %v329 = vpack.c.bf16 %v319, %v318
    %v330 = vpack.c.bf16 %v321, %v320
    %v331 = vpack.c.bf16 %v323, %v322
    %s332 = scalar_lea.vmem [#allocation3], 64
    %v333 = vld [vmem:[%s332] sm:$0xf]
    %v334 = vld [vmem:[%s332 + $0x4] sm:$0xf]
    %v335 = vld [vmem:[%s332 + $0x8] sm:$0xf]
    %v336 = vld [vmem:[%s332 + $0xc] sm:$0xf]
    %v337 = vld [vmem:[%s332 + $0x10] sm:$0xf]
    %v338 = vld [vmem:[%s332 + $0x14] sm:$0xf]
    %v339 = vld [vmem:[%s332 + $0x18] sm:$0xf]
    %v340 = vld [vmem:[%s332 + $0x1c] sm:$0xf]
    %v341 = vld [vmem:[%s332 + $0x20] sm:$0xf]
    %v342 = vld [vmem:[%s332 + $0x24] sm:$0xf]
    %v343 = vld [vmem:[%s332 + $0x28] sm:$0xf]
    %v344 = vld [vmem:[%s332 + $0x2c] sm:$0xf]
    %v345 = vld [vmem:[%s332 + $0x30] sm:$0xf]
    %v346 = vld [vmem:[%s332 + $0x34] sm:$0xf]
    %v347 = vld [vmem:[%s332 + $0x38] sm:$0xf]
    %v348 = vld [vmem:[%s332 + $0x3c] sm:$0xf]
    %s349 = scalar_lea.vmem %s5, 1
    %v350 = vld [vmem:[%s349] sm:$0x1]
    %v352 = vperm.slane %v350, 0
    %v370 = vunpack.c.l.b16 %v333
    %v371 = vunpack.c.l.b16 %v334
    %v372 = vunpack.c.l.b16 %v335
    %v373 = vunpack.c.l.b16 %v336
    %v374 = vunpack.c.l.b16 %v337
    %v375 = vunpack.c.l.b16 %v338
    %v376 = vunpack.c.l.b16 %v339
    %v377 = vunpack.c.l.b16 %v340
    %v378 = vunpack.c.l.b16 %v341
    %v379 = vunpack.c.l.b16 %v342
    %v380 = vunpack.c.l.b16 %v343
    %v381 = vunpack.c.l.b16 %v344
    %v382 = vunpack.c.l.b16 %v345
    %v383 = vunpack.c.l.b16 %v346
    %v384 = vunpack.c.l.b16 %v347
    %v385 = vunpack.c.l.b16 %v348
    %v386 = vpack.c.b16 %v371, %v370
    %v387 = vpack.c.b16 %v373, %v372
    %v388 = vpack.c.b16 %v375, %v374
    %v389 = vpack.c.b16 %v377, %v376
    %v390 = vpack.c.b16 %v379, %v378
    %v391 = vpack.c.b16 %v381, %v380
    %v392 = vpack.c.b16 %v383, %v382
    %v393 = vpack.c.b16 %v385, %v384
    %402 = vmatpush.bf16.msra.mxu0 %v393
    %403 = vmatpush.bf16.msra.mxu0 %v392
    %404 = vmatpush.bf16.msra.mxu0 %v391
    %405 = vmatpush.bf16.msra.mxu0 %v390
    %406 = vmatpush.bf16.msra.mxu0 %v389
    %407 = vmatpush.bf16.msra.mxu0 %v388
    %408 = vmatpush.bf16.msra.mxu0 %v387
    %409 = vmatpush.bf16.msra.mxu0 %v386
    %410 = vmatmul.bf16.gmra.mxu0 %v324
    %v411 = vpop.f32.mrf.mxu0
    %v412 = vadd.f32 %v352, %v411
    %v413 = vpop.f32.mrf.mxu0
    %v414 = vadd.f32 %v352, %v413
    %415 = vmatmul.bf16.gmra.mxu0 %v325
    %v416 = vpop.f32.mrf.mxu0
    %v417 = vadd.f32 %v352, %v416
    %v418 = vpop.f32.mrf.mxu0
    %v419 = vadd.f32 %v352, %v418
    %420 = vmatmul.bf16.gmra.mxu0 %v326
    %v421 = vpop.f32.mrf.mxu0
    %v422 = vadd.f32 %v352, %v421
    %v423 = vpop.f32.mrf.mxu0
    %v424 = vadd.f32 %v352, %v423
    %425 = vmatmul.bf16.gmra.mxu0 %v327
    %v426 = vpop.f32.mrf.mxu0
    %v427 = vadd.f32 %v352, %v426
    %v428 = vpop.f32.mrf.mxu0
    %v429 = vadd.f32 %v352, %v428
    %430 = vmatmul.bf16.gmra.mxu0 %v328
    %v431 = vpop.f32.mrf.mxu0
    %v432 = vadd.f32 %v352, %v431
    %v433 = vpop.f32.mrf.mxu0
    %v434 = vadd.f32 %v352, %v433
    %435 = vmatmul.bf16.gmra.mxu0 %v329
    %v436 = vpop.f32.mrf.mxu0
    %v437 = vadd.f32 %v352, %v436
    %v438 = vpop.f32.mrf.mxu0
    %v439 = vadd.f32 %v352, %v438
    %440 = vmatmul.bf16.gmra.mxu0 %v330
    %v441 = vpop.f32.mrf.mxu0
    %v442 = vadd.f32 %v352, %v441
    %v443 = vpop.f32.mrf.mxu0
    %v444 = vadd.f32 %v352, %v443
    %445 = vmatmul.bf16.gmra.mxu0 %v331
    %v446 = vpop.f32.mrf.mxu0
    %v447 = vadd.f32 %v352, %v446
    %v448 = vpop.f32.mrf.mxu0
    %v449 = vadd.f32 %v352, %v448
    %450 = vdwg.mxu0
    %v451 = vmax.f32 %v412, 0.0
    %v452 = vmax.f32 %v414, 0.0
    %v453 = vmax.f32 %v417, 0.0
    %v454 = vmax.f32 %v419, 0.0
    %v455 = vmax.f32 %v422, 0.0
    %v456 = vmax.f32 %v424, 0.0
    %v457 = vmax.f32 %v427, 0.0
    %v458 = vmax.f32 %v429, 0.0
    %v459 = vmax.f32 %v432, 0.0
    %v460 = vmax.f32 %v434, 0.0
    %v461 = vmax.f32 %v437, 0.0
    %v462 = vmax.f32 %v439, 0.0
    %v463 = vmax.f32 %v442, 0.0
    %v464 = vmax.f32 %v444, 0.0
    %v465 = vmax.f32 %v447, 0.0
    %v466 = vmax.f32 %v449, 0.0
    %v467 = vpack.c.bf16 %v452, %v451
    %v468 = vpack.c.bf16 %v454, %v453
    %v469 = vpack.c.bf16 %v456, %v455
    %v470 = vpack.c.bf16 %v458, %v457
    %v471 = vpack.c.bf16 %v460, %v459
    %v472 = vpack.c.bf16 %v462, %v461
    %v473 = vpack.c.bf16 %v464, %v463
    %v474 = vpack.c.bf16 %v466, %v465
    %s475 = scalar_lea.vmem [#allocation3], 128
    %v476 = vld [vmem:[%s475] sm:$0xf]
    %v477 = vld [vmem:[%s475 + $0x4] sm:$0xf]
    %v478 = vld [vmem:[%s475 + $0x8] sm:$0xf]
    %v479 = vld [vmem:[%s475 + $0xc] sm:$0xf]
    %v480 = vld [vmem:[%s475 + $0x10] sm:$0xf]
    %v481 = vld [vmem:[%s475 + $0x14] sm:$0xf]
    %v482 = vld [vmem:[%s475 + $0x18] sm:$0xf]
    %v483 = vld [vmem:[%s475 + $0x1c] sm:$0xf]
    %v484 = vld [vmem:[%s475 + $0x20] sm:$0xf]
    %v485 = vld [vmem:[%s475 + $0x24] sm:$0xf]
    %v486 = vld [vmem:[%s475 + $0x28] sm:$0xf]
    %v487 = vld [vmem:[%s475 + $0x2c] sm:$0xf]
    %v488 = vld [vmem:[%s475 + $0x30] sm:$0xf]
    %v489 = vld [vmem:[%s475 + $0x34] sm:$0xf]
    %v490 = vld [vmem:[%s475 + $0x38] sm:$0xf]
    %v491 = vld [vmem:[%s475 + $0x3c] sm:$0xf]
    %s492 = scalar_lea.vmem %s5, 2
    %v493 = vld [vmem:[%s492] sm:$0x1]
    %v495 = vperm.slane %v493, 0
    %v513 = vunpack.c.l.b16 %v476
    %v514 = vunpack.c.l.b16 %v477
    %v515 = vunpack.c.l.b16 %v478
    %v516 = vunpack.c.l.b16 %v479
    %v517 = vunpack.c.l.b16 %v480
    %v518 = vunpack.c.l.b16 %v481
    %v519 = vunpack.c.l.b16 %v482
    %v520 = vunpack.c.l.b16 %v483
    %v521 = vunpack.c.l.b16 %v484
    %v522 = vunpack.c.l.b16 %v485
    %v523 = vunpack.c.l.b16 %v486
    %v524 = vunpack.c.l.b16 %v487
    %v525 = vunpack.c.l.b16 %v488
    %v526 = vunpack.c.l.b16 %v489
    %v527 = vunpack.c.l.b16 %v490
    %v528 = vunpack.c.l.b16 %v491
    %v529 = vpack.c.b16 %v514, %v513
    %v530 = vpack.c.b16 %v516, %v515
    %v531 = vpack.c.b16 %v518, %v517
    %v532 = vpack.c.b16 %v520, %v519
    %v533 = vpack.c.b16 %v522, %v521
    %v534 = vpack.c.b16 %v524, %v523
    %v535 = vpack.c.b16 %v526, %v525
    %v536 = vpack.c.b16 %v528, %v527
    %545 = vmatpush.bf16.msra.mxu0 %v536
    %546 = vmatpush.bf16.msra.mxu0 %v535
    %547 = vmatpush.bf16.msra.mxu0 %v534
    %548 = vmatpush.bf16.msra.mxu0 %v533
    %549 = vmatpush.bf16.msra.mxu0 %v532
    %550 = vmatpush.bf16.msra.mxu0 %v531
    %551 = vmatpush.bf16.msra.mxu0 %v530
    %552 = vmatpush.bf16.msra.mxu0 %v529
    %553 = vmatmul.bf16.gmra.mxu0 %v467
    %v554 = vpop.f32.mrf.mxu0
    %v555 = vadd.f32 %v495, %v554
    %v556 = vpop.f32.mrf.mxu0
    %v557 = vadd.f32 %v495, %v556
    %558 = vmatmul.bf16.gmra.mxu0 %v468
    %v559 = vpop.f32.mrf.mxu0
    %v560 = vadd.f32 %v495, %v559
    %v561 = vpop.f32.mrf.mxu0
    %v562 = vadd.f32 %v495, %v561
    %563 = vmatmul.bf16.gmra.mxu0 %v469
    %v564 = vpop.f32.mrf.mxu0
    %v565 = vadd.f32 %v495, %v564
    %v566 = vpop.f32.mrf.mxu0
    %v567 = vadd.f32 %v495, %v566
    %568 = vmatmul.bf16.gmra.mxu0 %v470
    %v569 = vpop.f32.mrf.mxu0
    %v570 = vadd.f32 %v495, %v569
    %v571 = vpop.f32.mrf.mxu0
    %v572 = vadd.f32 %v495, %v571
    %573 = vmatmul.bf16.gmra.mxu0 %v471
    %v574 = vpop.f32.mrf.mxu0
    %v575 = vadd.f32 %v495, %v574
    %v576 = vpop.f32.mrf.mxu0
    %v577 = vadd.f32 %v495, %v576
    %578 = vmatmul.bf16.gmra.mxu0 %v472
    %v579 = vpop.f32.mrf.mxu0
    %v580 = vadd.f32 %v495, %v579
    %v581 = vpop.f32.mrf.mxu0
    %v582 = vadd.f32 %v495, %v581
    %583 = vmatmul.bf16.gmra.mxu0 %v473
    %v584 = vpop.f32.mrf.mxu0
    %v585 = vadd.f32 %v495, %v584
    %v586 = vpop.f32.mrf.mxu0
    %v587 = vadd.f32 %v495, %v586
    %588 = vmatmul.bf16.gmra.mxu0 %v474
    %v589 = vpop.f32.mrf.mxu0
    %v590 = vadd.f32 %v495, %v589
    %v591 = vpop.f32.mrf.mxu0
    %v592 = vadd.f32 %v495, %v591
    %593 = vdwg.mxu0
    %v594 = vmax.f32 %v555, 0.0
    %v595 = vmax.f32 %v557, 0.0
    %v596 = vmax.f32 %v560, 0.0
    %v597 = vmax.f32 %v562, 0.0
    %v598 = vmax.f32 %v565, 0.0
    %v599 = vmax.f32 %v567, 0.0
    %v600 = vmax.f32 %v570, 0.0
    %v601 = vmax.f32 %v572, 0.0
    %v602 = vmax.f32 %v575, 0.0
    %v603 = vmax.f32 %v577, 0.0
    %v604 = vmax.f32 %v580, 0.0
    %v605 = vmax.f32 %v582, 0.0
    %v606 = vmax.f32 %v585, 0.0
    %v607 = vmax.f32 %v587, 0.0
    %v608 = vmax.f32 %v590, 0.0
    %v609 = vmax.f32 %v592, 0.0
    %v610 = vpack.c.bf16 %v595, %v594
    %v611 = vpack.c.bf16 %v597, %v596
    %v612 = vpack.c.bf16 %v599, %v598
    %v613 = vpack.c.bf16 %v601, %v600
    %v614 = vpack.c.bf16 %v603, %v602
    %v615 = vpack.c.bf16 %v605, %v604
    %v616 = vpack.c.bf16 %v607, %v606
    %v617 = vpack.c.bf16 %v609, %v608
    %s618 = scalar_lea.vmem [#allocation3], 192
    %v619 = vld [vmem:[%s618] sm:$0xf]
    %v620 = vld [vmem:[%s618 + $0x4] sm:$0xf]
    %v621 = vld [vmem:[%s618 + $0x8] sm:$0xf]
    %v622 = vld [vmem:[%s618 + $0xc] sm:$0xf]
    %v623 = vld [vmem:[%s618 + $0x10] sm:$0xf]
    %v624 = vld [vmem:[%s618 + $0x14] sm:$0xf]
    %v625 = vld [vmem:[%s618 + $0x18] sm:$0xf]
    %v626 = vld [vmem:[%s618 + $0x1c] sm:$0xf]
    %v627 = vld [vmem:[%s618 + $0x20] sm:$0xf]
    %v628 = vld [vmem:[%s618 + $0x24] sm:$0xf]
    %v629 = vld [vmem:[%s618 + $0x28] sm:$0xf]
    %v630 = vld [vmem:[%s618 + $0x2c] sm:$0xf]
    %v631 = vld [vmem:[%s618 + $0x30] sm:$0xf]
    %v632 = vld [vmem:[%s618 + $0x34] sm:$0xf]
    %v633 = vld [vmem:[%s618 + $0x38] sm:$0xf]
    %v634 = vld [vmem:[%s618 + $0x3c] sm:$0xf]
    %s635 = scalar_lea.vmem %s5, 3
    %v636 = vld [vmem:[%s635] sm:$0x1]
    %v638 = vperm.slane %v636, 0
    %v656 = vunpack.c.l.b16 %v619
    %v657 = vunpack.c.l.b16 %v620
    %v658 = vunpack.c.l.b16 %v621
    %v659 = vunpack.c.l.b16 %v622
    %v660 = vunpack.c.l.b16 %v623
    %v661 = vunpack.c.l.b16 %v624
    %v662 = vunpack.c.l.b16 %v625
    %v663 = vunpack.c.l.b16 %v626
    %v664 = vunpack.c.l.b16 %v627
    %v665 = vunpack.c.l.b16 %v628
    %v666 = vunpack.c.l.b16 %v629
    %v667 = vunpack.c.l.b16 %v630
    %v668 = vunpack.c.l.b16 %v631
    %v669 = vunpack.c.l.b16 %v632
    %v670 = vunpack.c.l.b16 %v633
    %v671 = vunpack.c.l.b16 %v634
    %v672 = vpack.c.b16 %v657, %v656
    %v673 = vpack.c.b16 %v659, %v658
    %v674 = vpack.c.b16 %v661, %v660
    %v675 = vpack.c.b16 %v663, %v662
    %v676 = vpack.c.b16 %v665, %v664
    %v677 = vpack.c.b16 %v667, %v666
    %v678 = vpack.c.b16 %v669, %v668
    %v679 = vpack.c.b16 %v671, %v670
    %688 = vmatpush.bf16.msra.mxu0 %v679
    %689 = vmatpush.bf16.msra.mxu0 %v678
    %690 = vmatpush.bf16.msra.mxu0 %v677
    %691 = vmatpush.bf16.msra.mxu0 %v676
    %692 = vmatpush.bf16.msra.mxu0 %v675
    %693 = vmatpush.bf16.msra.mxu0 %v674
    %694 = vmatpush.bf16.msra.mxu0 %v673
    %695 = vmatpush.bf16.msra.mxu0 %v672
    %696 = vmatmul.bf16.gmra.mxu0 %v610
    %v697 = vpop.f32.mrf.mxu0
    %v698 = vadd.f32 %v638, %v697
    %v699 = vpop.f32.mrf.mxu0
    %v700 = vadd.f32 %v638, %v699
    %701 = vmatmul.bf16.gmra.mxu0 %v611
    %v702 = vpop.f32.mrf.mxu0
    %v703 = vadd.f32 %v638, %v702
    %v704 = vpop.f32.mrf.mxu0
    %v705 = vadd.f32 %v638, %v704
    %706 = vmatmul.bf16.gmra.mxu0 %v612
    %v707 = vpop.f32.mrf.mxu0
    %v708 = vadd.f32 %v638, %v707
    %v709 = vpop.f32.mrf.mxu0
    %v710 = vadd.f32 %v638, %v709
    %711 = vmatmul.bf16.gmra.mxu0 %v613
    %v712 = vpop.f32.mrf.mxu0
    %v713 = vadd.f32 %v638, %v712
    %v714 = vpop.f32.mrf.mxu0
    %v715 = vadd.f32 %v638, %v714
    %716 = vmatmul.bf16.gmra.mxu0 %v614
    %v717 = vpop.f32.mrf.mxu0
    %v718 = vadd.f32 %v638, %v717
    %v719 = vpop.f32.mrf.mxu0
    %v720 = vadd.f32 %v638, %v719
    %721 = vmatmul.bf16.gmra.mxu0 %v615
    %v722 = vpop.f32.mrf.mxu0
    %v723 = vadd.f32 %v638, %v722
    %v724 = vpop.f32.mrf.mxu0
    %v725 = vadd.f32 %v638, %v724
    %726 = vmatmul.bf16.gmra.mxu0 %v616
    %v727 = vpop.f32.mrf.mxu0
    %v728 = vadd.f32 %v638, %v727
    %v729 = vpop.f32.mrf.mxu0
    %v730 = vadd.f32 %v638, %v729
    %731 = vmatmul.bf16.gmra.mxu0 %v617
    %v732 = vpop.f32.mrf.mxu0
    %v733 = vadd.f32 %v638, %v732
    %v734 = vpop.f32.mrf.mxu0
    %v735 = vadd.f32 %v638, %v734
    %736 = vdwg.mxu0
    %v737 = vmax.f32 %v698, 0.0
    %v738 = vmax.f32 %v700, 0.0
    %v739 = vmax.f32 %v703, 0.0
    %v740 = vmax.f32 %v705, 0.0
    %v741 = vmax.f32 %v708, 0.0
    %v742 = vmax.f32 %v710, 0.0
    %v743 = vmax.f32 %v713, 0.0
    %v744 = vmax.f32 %v715, 0.0
    %v745 = vmax.f32 %v718, 0.0
    %v746 = vmax.f32 %v720, 0.0
    %v747 = vmax.f32 %v723, 0.0
    %v748 = vmax.f32 %v725, 0.0
    %v749 = vmax.f32 %v728, 0.0
    %v750 = vmax.f32 %v730, 0.0
    %v751 = vmax.f32 %v733, 0.0
    %v752 = vmax.f32 %v735, 0.0
    %v753 = vpack.c.bf16 %v738, %v737
    %v754 = vpack.c.bf16 %v740, %v739
    %v755 = vpack.c.bf16 %v742, %v741
    %v756 = vpack.c.bf16 %v744, %v743
    %v757 = vpack.c.bf16 %v746, %v745
    %v758 = vpack.c.bf16 %v748, %v747
    %v759 = vpack.c.bf16 %v750, %v749
    %v760 = vpack.c.bf16 %v752, %v751
    %s761 = scalar_lea.vmem [#allocation3], 256
    %v762 = vld [vmem:[%s761] sm:$0xf]
    %v763 = vld [vmem:[%s761 + $0x4] sm:$0xf]
    %v764 = vld [vmem:[%s761 + $0x8] sm:$0xf]
    %v765 = vld [vmem:[%s761 + $0xc] sm:$0xf]
    %v766 = vld [vmem:[%s761 + $0x10] sm:$0xf]
    %v767 = vld [vmem:[%s761 + $0x14] sm:$0xf]
    %v768 = vld [vmem:[%s761 + $0x18] sm:$0xf]
    %v769 = vld [vmem:[%s761 + $0x1c] sm:$0xf]
    %v770 = vld [vmem:[%s761 + $0x20] sm:$0xf]
    %v771 = vld [vmem:[%s761 + $0x24] sm:$0xf]
    %v772 = vld [vmem:[%s761 + $0x28] sm:$0xf]
    %v773 = vld [vmem:[%s761 + $0x2c] sm:$0xf]
    %v774 = vld [vmem:[%s761 + $0x30] sm:$0xf]
    %v775 = vld [vmem:[%s761 + $0x34] sm:$0xf]
    %v776 = vld [vmem:[%s761 + $0x38] sm:$0xf]
    %v777 = vld [vmem:[%s761 + $0x3c] sm:$0xf]
    %s778 = scalar_lea.vmem %s5, 4
    %v779 = vld [vmem:[%s778] sm:$0x1]
    %v781 = vperm.slane %v779, 0
    %v799 = vunpack.c.l.b16 %v762
    %v800 = vunpack.c.l.b16 %v763
    %v801 = vunpack.c.l.b16 %v764
    %v802 = vunpack.c.l.b16 %v765
    %v803 = vunpack.c.l.b16 %v766
    %v804 = vunpack.c.l.b16 %v767
    %v805 = vunpack.c.l.b16 %v768
    %v806 = vunpack.c.l.b16 %v769
    %v807 = vunpack.c.l.b16 %v770
    %v808 = vunpack.c.l.b16 %v771
    %v809 = vunpack.c.l.b16 %v772
    %v810 = vunpack.c.l.b16 %v773
    %v811 = vunpack.c.l.b16 %v774
    %v812 = vunpack.c.l.b16 %v775
    %v813 = vunpack.c.l.b16 %v776
    %v814 = vunpack.c.l.b16 %v777
    %v815 = vpack.c.b16 %v800, %v799
    %v816 = vpack.c.b16 %v802, %v801
    %v817 = vpack.c.b16 %v804, %v803
    %v818 = vpack.c.b16 %v806, %v805
    %v819 = vpack.c.b16 %v808, %v807
    %v820 = vpack.c.b16 %v810, %v809
    %v821 = vpack.c.b16 %v812, %v811
    %v822 = vpack.c.b16 %v814, %v813
    %831 = vmatpush.bf16.msra.mxu0 %v822
    %832 = vmatpush.bf16.msra.mxu0 %v821
    %833 = vmatpush.bf16.msra.mxu0 %v820
    %834 = vmatpush.bf16.msra.mxu0 %v819
    %835 = vmatpush.bf16.msra.mxu0 %v818
    %836 = vmatpush.bf16.msra.mxu0 %v817
    %837 = vmatpush.bf16.msra.mxu0 %v816
    %838 = vmatpush.bf16.msra.mxu0 %v815
    %839 = vmatmul.bf16.gmra.mxu0 %v753
    %v840 = vpop.f32.mrf.mxu0
    %v841 = vadd.f32 %v781, %v840
    %v842 = vpop.f32.mrf.mxu0
    %v843 = vadd.f32 %v781, %v842
    %844 = vmatmul.bf16.gmra.mxu0 %v754
    %v845 = vpop.f32.mrf.mxu0
    %v846 = vadd.f32 %v781, %v845
    %v847 = vpop.f32.mrf.mxu0
    %v848 = vadd.f32 %v781, %v847
    %849 = vmatmul.bf16.gmra.mxu0 %v755
    %v850 = vpop.f32.mrf.mxu0
    %v851 = vadd.f32 %v781, %v850
    %v852 = vpop.f32.mrf.mxu0
    %v853 = vadd.f32 %v781, %v852
    %854 = vmatmul.bf16.gmra.mxu0 %v756
    %v855 = vpop.f32.mrf.mxu0
    %v856 = vadd.f32 %v781, %v855
    %v857 = vpop.f32.mrf.mxu0
    %v858 = vadd.f32 %v781, %v857
    %859 = vmatmul.bf16.gmra.mxu0 %v757
    %v860 = vpop.f32.mrf.mxu0
    %v861 = vadd.f32 %v781, %v860
    %v862 = vpop.f32.mrf.mxu0
    %v863 = vadd.f32 %v781, %v862
    %864 = vmatmul.bf16.gmra.mxu0 %v758
    %v865 = vpop.f32.mrf.mxu0
    %v866 = vadd.f32 %v781, %v865
    %v867 = vpop.f32.mrf.mxu0
    %v868 = vadd.f32 %v781, %v867
    %869 = vmatmul.bf16.gmra.mxu0 %v759
    %v870 = vpop.f32.mrf.mxu0
    %v871 = vadd.f32 %v781, %v870
    %v872 = vpop.f32.mrf.mxu0
    %v873 = vadd.f32 %v781, %v872
    %874 = vmatmul.bf16.gmra.mxu0 %v760
    %v875 = vpop.f32.mrf.mxu0
    %v876 = vadd.f32 %v781, %v875
    %v877 = vpop.f32.mrf.mxu0
    %v878 = vadd.f32 %v781, %v877
    %879 = vdwg.mxu0
    %v880 = vmax.f32 %v841, 0.0
    %v881 = vmax.f32 %v843, 0.0
    %v882 = vmax.f32 %v846, 0.0
    %v883 = vmax.f32 %v848, 0.0
    %v884 = vmax.f32 %v851, 0.0
    %v885 = vmax.f32 %v853, 0.0
    %v886 = vmax.f32 %v856, 0.0
    %v887 = vmax.f32 %v858, 0.0
    %v888 = vmax.f32 %v861, 0.0
    %v889 = vmax.f32 %v863, 0.0
    %v890 = vmax.f32 %v866, 0.0
    %v891 = vmax.f32 %v868, 0.0
    %v892 = vmax.f32 %v871, 0.0
    %v893 = vmax.f32 %v873, 0.0
    %v894 = vmax.f32 %v876, 0.0
    %v895 = vmax.f32 %v878, 0.0
    %v896 = vld [vmem:[%s6] sm:$0xf]
    %v897 = vpack.c.bf16 %v881, %v880
    %v898 = vpack.c.bf16 %v883, %v882
    %v899 = vpack.c.bf16 %v885, %v884
    %v900 = vpack.c.bf16 %v887, %v886
    %v901 = vpack.c.bf16 %v889, %v888
    %v902 = vpack.c.bf16 %v891, %v890
    %v903 = vpack.c.bf16 %v893, %v892
    %v904 = vpack.c.bf16 %v895, %v894
    %905 = vmatpush.bf16.xpose.msra.mxu0 %v904
    %906 = vmatpush.bf16.xpose.msra.mxu0 %v903
    %907 = vmatpush.bf16.xpose.msra.mxu0 %v902
    %908 = vmatpush.bf16.xpose.msra.mxu0 %v901
    %909 = vmatpush.bf16.xpose.msra.mxu0 %v900
    %910 = vmatpush.bf16.xpose.msra.mxu0 %v899
    %911 = vmatpush.bf16.xpose.msra.mxu0 %v898
    %912 = vmatpush.bf16.xpose.msra.mxu0 %v897
    %913 = vmatmul.bf16.gmra.mxu0 %v896
    %v914 = vpop.f32.mrf.mxu0
    %v915 = vadd.f32 0.0, %v914
    %v916 = vpop.f32.mrf.mxu0
    %917 = vdwg.mxu0
    %v918 = vld [vmem:[#allocation2] sm:$0x1]
    %920 = vset.pattern.permute.xlu0 0
    %921 = vperm.xlu0 %920, %v918
    %v922 = vpop.permute.xlu0 %921
    %v924 = vperm.slane %v922, 0
    %v925 = vadd.f32 %v915, %v924
    %v926 = vand.u32 2147483647, %v925
    %v927 = vld [vmem:[%s1] sm:$0x1]
    %v928 = vlog2.pop %v927
    %v929 = vmul.f32 %v928, 0.6931472
    %v930 = vadd.f32 %v926, 0.001
    %v931 = vlog2.pop %v930
    %v932 = vmul.f32 %v931, 0.6931472
    %v933 = vsub.f32 %v929, %v932
    %934 = vst [vmem:[#allocation6] sm:$0x1] %v933
    // Predicated region
    $region38: #{tpu_custom_call.1} parent=1 // pred_check
      _
    $region39: #{tpu_custom_call.1} parent=1 // pred_check_branch
      %936 = sbr.rel (0) target = $region41
    $region40: #{tpu_custom_call.1} parent=1 // pred_region
      %938 = vsyncadd [#allocation5], 0
      %s940 = sshll.u32 [#allocation6], 4
      %s941 = int_to_ptr.vmem [resolvable:$true] %s940
      %s942 = sshll.u32 %s8, 4
      %s943 = int_to_ptr.hbm [resolvable:$true] %s942
      %945 = dma.vmem_to_hbm [thread:$0]  %s941, 16, %s943, [#allocation5]
    $region41: #{tpu_custom_call.1} parent=1 // pred_fallthru
      _
    // Predicated region
    $region42: #{tpu_custom_call.1} parent=1 // pred_check
      _
    $region43: #{tpu_custom_call.1} parent=1 // pred_check_branch
      %947 = sbr.rel (0) target = $region45
    $region44: #{tpu_custom_call.1} parent=1 // pred_region
      %949 = dma.done [#allocation5], 16
    $region45: #{tpu_custom_call.1} parent=1 // pred_fallthru
      _
    %950 = vsyncpa [#allocation4], 1
    %951 = vsyncpa [#allocation5], 1

</llo_original>
